<compile_context>
chip_gen: v7x
topology: tpu7x:2x2x1
jax: 0.10.0
libtpu: 0.0.40
codegen_flags: <defaults>
</compile_context>

<pallas_src>
import jax
import jax.numpy as jnp
from jax.experimental import pallas as pl
from jax.experimental.pallas import tpu as pltpu

PACK = 8  # logical rows packed per lane-dense row: 8 * 16 = 128 lanes


def _packed_linear_ones_relu_kernel(x_ref, w_ref, b_ref, o_ref):
    # other=None specialization: residual is a compile-time constant 1.0.
    y = jnp.dot(x_ref[...], w_ref[...], preferred_element_type=jnp.float32)
    y = y + b_ref[...] + 1.0
    o_ref[...] = jnp.maximum(y, 0.0).astype(o_ref.dtype)


def _packed_linear_add_relu_kernel(x_ref, w_ref, b_ref, other_ref, o_ref):
    # Fused hot path: matmul (MXU) + bias + residual add + relu (VPU).
    y = jnp.dot(x_ref[...], w_ref[...], preferred_element_type=jnp.float32)
    y = y + b_ref[...] + other_ref[...].astype(jnp.float32)
    o_ref[...] = jnp.maximum(y, 0.0).astype(o_ref.dtype)


def model_forward(x, weight, bias, other=None, *, tile_rows=32768):
    """x: (B, 16)  weight: (6, 16) [PyTorch layout]  bias: (6,)  other: (B, 6) or None."""
    B, in_features = x.shape
    out_features = weight.shape[0]
    assert weight.shape == (out_features, in_features)
    assert bias.shape == (out_features,)
    if other is not None:
        assert other.shape == (B, out_features)

    # --- pad batch to a multiple of PACK so the packed reshape is exact -----
    B_pad = ((B + PACK - 1) // PACK) * PACK
    if B_pad != B:
        x = jnp.pad(x, ((0, B_pad - B), (0, 0)))
        if other is not None:
            other = jnp.pad(other, ((0, B_pad - B), (0, 0)))

    R = B_pad // PACK                  # packed rows
    K = PACK * in_features             # 128  (lane-dense contraction dim)
    N = PACK * out_features            # 48   (8 logical output rows per row)

    # --- layout plumbing (all free reshapes / tiny one-time tensors) --------
    x_dense = x.reshape(R, K)                                   # (R, 128), free
    # Block-diagonal weight: (x_dense @ w_big)[i, 6j+c] == (x @ W^T)[8i+j, c]
    w_big = jnp.kron(jnp.eye(PACK, dtype=weight.dtype), weight.T)   # (128, 48)
    b_big = jnp.tile(bias, PACK).reshape(1, N)                      # (1, 48)
    other_dense = None if other is None else other.reshape(R, N)    # (R, 48), free

    # --- tiling --------------------------------------------------------------
    assert tile_rows % PACK == 0, "tile_rows must be a multiple of 8"
    TR = R if R <= tile_rows // PACK else tile_rows // PACK     # packed-row tile
    if R > TR:
        # (8, 128) sublane rule on partial blocks: second-last dim must be 8-aligned.
        assert TR % 8 == 0, "packed-row tile must be a multiple of 8 when tiling"
    grid = (pl.cdiv(R, TR),)
    # NOTE: when R % TR != 0 the trailing partial block matmuls padded rows;
    # those results are discarded on the masked writeback (benign).

    x_spec = pl.BlockSpec((TR, K), lambda i: (i, 0))
    w_spec = pl.BlockSpec((K, N), lambda i: (0, 0))     # tiny resident block
    b_spec = pl.BlockSpec((1, N), lambda i: (0, 0))     # tiny resident block
    o_spec = pl.BlockSpec((TR, N), lambda i: (i, 0))

    # VMEM accounting (lane dim padded to 128): each double-buffered stream
    # costs 2 * TR * 128 * 4 B; with `other` present that is 3 streams
    # -> ~12 MiB at TR=4096 (TB=32768 rows). 32 MiB limit leaves headroom on
    # v5e/v6e/v7x.
    cp = pltpu.CompilerParams(
        dimension_semantics=("parallel",),          # lets v7x split batch across TCs
        vmem_limit_bytes=32 * 1024 * 1024,
    )
    out_shape = jax.ShapeDtypeStruct((R, N), x.dtype)

    if other_dense is None:
        out_dense = pl.pallas_call(
            _packed_linear_ones_relu_kernel,
            out_shape=out_shape,
            grid_spec=pl.GridSpec(
                grid=grid,
                in_specs=[x_spec, w_spec, b_spec],
                out_specs=o_spec,
            ),
            compiler_params=cp,
        )(x_dense, w_big, b_big)
    else:
        other_spec = pl.BlockSpec((TR, N), lambda i: (i, 0))
        out_dense = pl.pallas_call(
            _packed_linear_add_relu_kernel,
            out_shape=out_shape,
            grid_spec=pl.GridSpec(
                grid=grid,
                in_specs=[x_spec, w_spec, b_spec, other_spec],
                out_specs=o_spec,
            ),
            compiler_params=cp,
        )(x_dense, w_big, b_big, other_dense)

    # Free contiguous reshape back to (B_pad, 6); drop padded rows if any.
    out = out_dense.reshape(B_pad, out_features)
    return out[:B] if B_pad != B else out


if __name__ == "__main__":
    key = jax.random.PRNGKey(0)
    k_x, k_w, k_b, k_o, k_x2 = jax.random.split(key, 5)

    B, IN, OUT = 8, 16, 6

    # Deterministic synthetic parameters (PyTorch Linear shapes: W (6,16), b (6,))
    weight = jax.random.normal(k_w, (OUT, IN), dtype=jnp.float32) * 0.1
    bias = jax.random.normal(k_b, (OUT,), dtype=jnp.float32) * 0.1
    x = jax.random.normal(k_x, (B, IN), dtype=jnp.float32)

    # Path 1: other=None -> specialized +1.0 kernel.
    out_none = jax.block_until_ready(model_forward(x, weight, bias))
    ref_none = jnp.maximum(x @ weight.T + bias + 1.0, 0.0)
    assert out_none.shape == (B, OUT)
    assert jnp.allclose(out_none, ref_none, atol=1e-5), "mismatch (other=None)"

    # Path 2: explicit residual tensor.
    other = jax.random.normal(k_o, (B, OUT), dtype=jnp.float32)
    out_other = jax.block_until_ready(model_forward(x, weight, bias, other))
    ref_other = jnp.maximum(x @ weight.T + bias + other, 0.0)
    assert out_other.shape == (B, OUT)
    assert jnp.allclose(out_other, ref_other, atol=1e-5), "mismatch (other given)"

    # Path 3: batch not a multiple of 8 -> exercises the padding path.
    B2 = 11
    x2 = jax.random.normal(k_x2, (B2, IN), dtype=jnp.float32)
    out_pad = jax.block_until_ready(model_forward(x2, weight, bias))
    ref_pad = jnp.maximum(x2 @ weight.T + bias + 1.0, 0.0)
    assert out_pad.shape == (B2, OUT)
    assert jnp.allclose(out_pad, ref_pad, atol=1e-5), "mismatch (padded batch)"

    print("KERNEL_OK")
</pallas_src>

<mosaic_0001>
module attributes {stable_mosaic.version = 11 : i64} {
  func.func @_packed_linear_ones_relu_kernel(%arg0: i32, %arg1: memref<1x128xf32, #tpu.memory_space<vmem>>, %arg2: memref<128x48xf32, #tpu.memory_space<vmem>>, %arg3: memref<1x48xf32, #tpu.memory_space<vmem>>, %arg4: memref<1x48xf32, #tpu.memory_space<vmem>>) attributes {dimension_semantics = [#tpu.dimension_semantics<parallel>], iteration_bounds = array<i64: 1>, scalar_prefetch = 0 : i64, scratch_operands = 0 : i64, tpu.core_type = #tpu.core_type<tc>, window_params = [{transform_indices = @transform_0, window_bounds = array<i64: 1, 128>}, {pipeline_mode = #tpu.pipeline_mode<synchronous>, transform_indices = @transform_1, window_bounds = array<i64: 128, 48>}, {pipeline_mode = #tpu.pipeline_mode<synchronous>, transform_indices = @transform_2, window_bounds = array<i64: 1, 48>}, {transform_indices = @transform_3, window_bounds = array<i64: 1, 48>}]} {
    %c0 = arith.constant 0 : index
    %c0_0 = arith.constant 0 : index
    %0 = vector.load %arg1[%c0, %c0_0] : memref<1x128xf32, #tpu.memory_space<vmem>>, vector<1x128xf32>
    %c0_1 = arith.constant 0 : index
    %c0_2 = arith.constant 0 : index
    %1 = vector.load %arg2[%c0_1, %c0_2] : memref<128x48xf32, #tpu.memory_space<vmem>>, vector<128x48xf32>
    %cst = arith.constant dense<0.000000e+00> : vector<1x48xf32>
    %2 = tpu.matmul %0, %1, %cst {dimension_numbers = #tpu.dot_dimension_numbers<[1], [0], [0], [1], [0, 0, 1, 1], [], []>} : vector<1x128xf32>, vector<128x48xf32>, vector<1x48xf32> -> vector<1x48xf32>
    %c0_3 = arith.constant 0 : index
    %c0_4 = arith.constant 0 : index
    %3 = vector.load %arg3[%c0_3, %c0_4] : memref<1x48xf32, #tpu.memory_space<vmem>>, vector<1x48xf32>
    %4 = arith.addf %2, %3 : vector<1x48xf32>
    %cst_5 = arith.constant 1.000000e+00 : f32
    %5 = vector.broadcast %cst_5 : f32 to vector<1x48xf32>
    %6 = arith.addf %4, %5 : vector<1x48xf32>
    %cst_6 = arith.constant 0.000000e+00 : f32
    %7 = vector.broadcast %cst_6 : f32 to vector<1x48xf32>
    %8 = arith.maximumf %6, %7 : vector<1x48xf32>
    %c0_7 = arith.constant 0 : index
    %c0_8 = arith.constant 0 : index
    %9 = vector.load %arg4[%c0_7, %c0_8] : memref<1x48xf32, #tpu.memory_space<vmem>>, vector<1x48xf32>
    tpu.vector_store %arg4[%c0_7, %c0_8], %8 {strides = array<i32>} : memref<1x48xf32, #tpu.memory_space<vmem>>, vector<1x48xf32>,
    return
  }
  func.func @transform_0(%arg0: i32) -> (i32, i32) {
    %c0_i32 = arith.constant 0 : i32
    %c0_i32_0 = arith.constant 0 : i32
    return %arg0, %c0_i32 : i32, i32
  }
  func.func @transform_1(%arg0: i32) -> (i32, i32) {
    %c0_i32 = arith.constant 0 : i32
    %c0_i32_0 = arith.constant 0 : i32
    %c0_i32_1 = arith.constant 0 : i32
    return %c0_i32, %c0_i32_0 : i32, i32
  }
  func.func @transform_2(%arg0: i32) -> (i32, i32) {
    %c0_i32 = arith.constant 0 : i32
    %c0_i32_0 = arith.constant 0 : i32
    %c0_i32_1 = arith.constant 0 : i32
    return %c0_i32, %c0_i32_0 : i32, i32
  }
  func.func @transform_3(%arg0: i32) -> (i32, i32) {
    %c0_i32 = arith.constant 0 : i32
    %c0_i32_0 = arith.constant 0 : i32
    return %arg0, %c0_i32 : i32, i32
  }
}

</mosaic_0001>

<llo_original>
// kernel: tpu_custom_call.1
$region0: #{tpu_custom_call.1}
  #allocation0 [shape = 'u32[]', space=smem, size = 0x4, offset = 0x4, fixed_abs, tag = 'smem constant byte address 0x4 - core index']
  #allocation1 [shape = 'u32[144,128]{1,0:T(1,128)}', space=vmem, size = 0x12000, scoped, tag = 'internal scratch']
  %s0 = inlined_call_operand.vmem [shape: f32[1,128], index: 0, kind: input, shape index: {}]
  %s1 = inlined_call_operand.vmem [shape: f32[128,48], index: 1, kind: input, shape index: {}]
  %s2 = inlined_call_operand.vmem [shape: f32[1,48], index: 2, kind: input, shape index: {}]
  %s3 = inlined_call_operand.hbm [shape: f32[1,48], index: 3, kind: output, shape index: {}]
  %s4 = sld [smem:[#allocation0]]
  $region22: #{tpu_custom_call.1} parent=0
    _
  %s6 = ssub.s32 1, %s4
  %s7 = scalar_select 0, %s6, %s4
  $region1: #{tpu_custom_call.1} parent=0
    #allocation2 [shape = 'u8[512]{0}', space=vmem, size = 0x400, scoped, tag = 'output window, operand 0, single buffered']
    #allocation3 [shape = 's32[1]{0}', space=sflag, size = 0x4, scoped, tag = 'scoped memory for tpu_custom_call.1']
    %8 = vsyncpa [#allocation3], 0
    // Predicated region
    $region2: #{tpu_custom_call.1} parent=1 // pred_check
      _
    $region3: #{tpu_custom_call.1} parent=1 // pred_check_branch
      %10 = sbr.rel (0) target = $region5
    $region4: #{tpu_custom_call.1} parent=1 // pred_region
      _
    $region5: #{tpu_custom_call.1} parent=1 // pred_fallthru
      _
    // Predicated region
    $region6: #{tpu_custom_call.1} parent=1 // pred_check
      _
    $region7: #{tpu_custom_call.1} parent=1 // pred_check_branch
      %12 = sbr.rel (0) target = $region9
    $region8: #{tpu_custom_call.1} parent=1 // pred_region
      _
    $region9: #{tpu_custom_call.1} parent=1 // pred_fallthru
      _
    // Predicated region
    $region10: #{tpu_custom_call.1} parent=1 // pred_check
      _
    $region11: #{tpu_custom_call.1} parent=1 // pred_check_branch
      %14 = sbr.rel (0) target = $region13
    $region12: #{tpu_custom_call.1} parent=1 // pred_region
      _
    $region13: #{tpu_custom_call.1} parent=1 // pred_fallthru
      _
    %v15 = vld [vmem:[%s0] sm:$0x1]
    %v16 = vld [vmem:[%s1] sm:$0xff]
    %v17 = vld [vmem:[%s1 + $0x8] sm:$0xff]
    %v18 = vld [vmem:[%s1 + $0x10] sm:$0xff]
    %v19 = vld [vmem:[%s1 + $0x18] sm:$0xff]
    %v20 = vld [vmem:[%s1 + $0x20] sm:$0xff]
    %v21 = vld [vmem:[%s1 + $0x28] sm:$0xff]
    %v22 = vld [vmem:[%s1 + $0x30] sm:$0xff]
    %v23 = vld [vmem:[%s1 + $0x38] sm:$0xff]
    %v24 = vld [vmem:[%s1 + $0x40] sm:$0xff]
    %v25 = vld [vmem:[%s1 + $0x48] sm:$0xff]
    %v26 = vld [vmem:[%s1 + $0x50] sm:$0xff]
    %v27 = vld [vmem:[%s1 + $0x58] sm:$0xff]
    %v28 = vld [vmem:[%s1 + $0x60] sm:$0xff]
    %v29 = vld [vmem:[%s1 + $0x68] sm:$0xff]
    %v30 = vld [vmem:[%s1 + $0x70] sm:$0xff]
    %v31 = vld [vmem:[%s1 + $0x78] sm:$0xff]
    %v32 = vld [vmem:[%s2] sm:$0x1]
    %33 = vmatprep.subr.mxu0 0.0
    %34 = vmatpush1.msra.mxu0 %v16
    %35 = vmatprep.subr.mxu0 0.0
    %36 = vmatpush1.msra.mxu0 %v17
    %37 = vmatprep.subr.mxu0 0.0
    %38 = vmatpush1.msra.mxu0 %v18
    %39 = vmatprep.subr.mxu0 0.0
    %40 = vmatpush1.msra.mxu0 %v19
    %41 = vmatprep.subr.mxu0 0.0
    %42 = vmatpush1.msra.mxu0 %v20
    %43 = vmatprep.subr.mxu0 0.0
    %44 = vmatpush1.msra.mxu0 %v21
    %45 = vmatprep.subr.mxu0 0.0
    %46 = vmatpush1.msra.mxu0 %v22
    %47 = vmatprep.subr.mxu0 0.0
    %48 = vmatpush1.msra.mxu0 %v23
    %49 = vmatprep.subr.mxu0 0.0
    %50 = vmatpush1.msra.mxu0 %v24
    %51 = vmatprep.subr.mxu0 0.0
    %52 = vmatpush1.msra.mxu0 %v25
    %53 = vmatprep.subr.mxu0 0.0
    %54 = vmatpush1.msra.mxu0 %v26
    %55 = vmatprep.subr.mxu0 0.0
    %56 = vmatpush1.msra.mxu0 %v27
    %57 = vmatprep.subr.mxu0 0.0
    %58 = vmatpush1.msra.mxu0 %v28
    %59 = vmatprep.subr.mxu0 0.0
    %60 = vmatpush1.msra.mxu0 %v29
    %61 = vmatprep.subr.mxu0 0.0
    %62 = vmatpush1.msra.mxu0 %v30
    %63 = vmatprep.subr.mxu0 0.0
    %64 = vmatpush1.msra.mxu0 %v31
    %65 = vmatprep.subr.mxu0 0.0
    %66 = vmatpush1.msra.mxu0 0.0
    %67 = vmatprep.subr.mxu0 0.0
    %68 = vmatpush1.msra.mxu0 0.0
    %69 = vmatprep.subr.mxu0 0.0
    %70 = vmatpush1.msra.mxu0 0.0
    %71 = vmatprep.subr.mxu0 0.0
    %72 = vmatpush1.msra.mxu0 0.0
    %73 = vmatprep.subr.mxu0 0.0
    %74 = vmatpush1.msra.mxu0 0.0
    %75 = vmatprep.subr.mxu0 0.0
    %76 = vmatpush1.msra.mxu0 0.0
    %77 = vmatprep.subr.mxu0 0.0
    %78 = vmatpush1.msra.mxu0 0.0
    %79 = vmatprep.subr.mxu0 0.0
    %80 = vmatpush1.msra.mxu0 0.0
    %81 = vmatprep.subr.mxu0 0.0
    %82 = vmatpush1.msra.mxu0 0.0
    %83 = vmatprep.subr.mxu0 0.0
    %84 = vmatpush1.msra.mxu0 0.0
    %85 = vmatprep.subr.mxu0 0.0
    %86 = vmatpush1.msra.mxu0 0.0
    %87 = vmatprep.subr.mxu0 0.0
    %88 = vmatpush1.msra.mxu0 0.0
    %89 = vmatprep.subr.mxu0 0.0
    %90 = vmatpush1.msra.mxu0 0.0
    %91 = vmatprep.subr.mxu0 0.0
    %92 = vmatpush1.msra.mxu0 0.0
    %93 = vmatprep.subr.mxu0 0.0
    %94 = vmatpush1.msra.mxu0 0.0
    %95 = vmatprep.subr.mxu0 0.0
    %96 = vmatpush1.msra.mxu0 0.0
    %97 = vmatprep.mubr.f32.mxu0 0.0
    %98 = vmatmul.mubr.f32.gmra.mrb[0].mxu0 %v15
    %v99 = vpop.f32.mrb[0].mxu0
    %v100 = vadd.f32 %v32, %v99
    %v101 = vpop.f32.mrb[0].mxu0
    %102 = vdwg.mxu0
    %v103 = vadd.f32 %v100, 1.0
    %v104 = vmax.f32 %v103, 0.0
    %vm105 = vcmask 385024
    %106 = vst.msk [vmem:[#allocation2] sm:$0x1] %vm105, %v104
    // Predicated region
    $region14: #{tpu_custom_call.1} parent=1 // pred_check
      _
    $region15: #{tpu_custom_call.1} parent=1 // pred_check_branch
      %108 = sbr.rel (0) target = $region17
    $region16: #{tpu_custom_call.1} parent=1 // pred_region
      %s110 = ssub.s32 16, 16
      %111 = vsyncadd [#allocation3], %s110
      %s113 = sshll.u32 [#allocation2], 4
      %s114 = int_to_ptr.vmem [resolvable:$true] %s113
      %116 = dma.vmem_to_hbm [thread:$0]  %s114, 16, %s3, [#allocation3]
    $region17: #{tpu_custom_call.1} parent=1 // pred_fallthru
      _
    // Predicated region
    $region18: #{tpu_custom_call.1} parent=1 // pred_check
      _
    $region19: #{tpu_custom_call.1} parent=1 // pred_check_branch
      %118 = sbr.rel (0) target = $region21
    $region20: #{tpu_custom_call.1} parent=1 // pred_region
      %119 = dma.done [#allocation3], 16
    $region21: #{tpu_custom_call.1} parent=1 // pred_fallthru
      _
    %120 = vsyncpa [#allocation3], 1

</llo_original>
